<compile_context>
chip_gen: v5e
topology: v5e:2x2
jax: 0.10.0
libtpu: 0.0.40
codegen_flags: <defaults>
</compile_context>

<pallas_src>
import jax
import jax.numpy as jnp
from jax.experimental import pallas as pl
from jax.experimental.pallas import tpu as pltpu


def _mlp_kernel(x_ref, w1_ref, b1_ref, w2_ref, b2_ref, w3_ref, b3_ref, o_ref):
    """Fused 3-layer MLP on one (TB, input_dim) batch tile."""
    # In-kernel bf16 cast of the f32 input tile (avoids a wrapper-side HBM pass).
    x = x_ref[...].astype(jnp.bfloat16)

    # Layer 1: Linear + LeakyReLU(0.2)   (f32 accumulate, f32 activation)
    h = jnp.dot(x, w1_ref[...], preferred_element_type=jnp.float32) + b1_ref[...]
    h = jnp.maximum(h, 0.2 * h)

    # Layer 2: Linear + LeakyReLU(0.2)
    h = jnp.dot(h.astype(jnp.bfloat16), w2_ref[...],
                preferred_element_type=jnp.float32) + b2_ref[...]
    h = jnp.maximum(h, 0.2 * h)

    # Layer 3 (output, latent_dim wide): Linear only
    out = jnp.dot(h.astype(jnp.bfloat16), w3_ref[...],
                  preferred_element_type=jnp.float32) + b3_ref[...]
    o_ref[...] = out.astype(o_ref.dtype)


def _choose_tb(batch):
    """Adaptive batch tile: minimal padding for small B, amortized tiles for big B."""
    if batch <= 256:
        return 8 * pl.cdiv(max(batch, 1), 8)   # one grid step, pad to sublane multiple
    if batch < 1024:
        return 256                              # 2..4 grid steps (feeds both v7x TCs)
    return 512                                  # >= 2 grid steps, amortizes per-step cost


def dense_encoder_forward(x, params, *, tb=None):
    """x: (B, input_dim) float32; params: list of (W (in,out) f32, b (1,out) f32)."""
    (w1, b1), (w2, b2), (w3, b3) = params
    B, input_dim = x.shape
    hidden1 = w1.shape[1]
    hidden2 = w2.shape[1]
    latent_dim = w3.shape[1]

    if tb is None:
        tb = _choose_tb(B)

    # bf16 matmul weights (resident, one-time tiny cast); biases stay f32.
    w1b = w1.astype(jnp.bfloat16)
    w2b = w2.astype(jnp.bfloat16)
    w3b = w3.astype(jnp.bfloat16)

    # Pad batch rows to a multiple of the tile; padded rows are sliced off below.
    n_tiles = pl.cdiv(B, tb)
    b_pad = n_tiles * tb
    x_p = jnp.pad(x, ((0, b_pad - B), (0, 0))) if b_pad != B else x

    flops = 2 * B * (input_dim * hidden1 + hidden1 * hidden2 + hidden2 * latent_dim)
    bytes_accessed = (
        B * input_dim * 4                              # f32 X
        + (w1b.size + w2b.size + w3b.size) * 2         # bf16 weights (resident)
        + (b1.size + b2.size + b3.size) * 4            # f32 biases
        + B * latent_dim * 4                           # f32 output (latent width)
    )

    resident = lambda i: (0, 0)   # weights/biases: same block every grid step

    def _run(weight_pipeline_mode):
        def wspec(shape):
            if weight_pipeline_mode is None:
                return pl.BlockSpec(shape, resident)
            return pl.BlockSpec(shape, resident, pipeline_mode=weight_pipeline_mode)

        return pl.pallas_call(
            _mlp_kernel,
            out_shape=jax.ShapeDtypeStruct((b_pad, latent_dim), jnp.float32),
            grid=(n_tiles,),
            in_specs=[
                pl.BlockSpec((tb, input_dim), lambda i: (i, 0)),   # X tile (pipelined)
                wspec((input_dim, hidden1)),                       # W1
                wspec((1, hidden1)),                               # b1
                wspec((hidden1, hidden2)),                         # W2
                wspec((1, hidden2)),                               # b2
                wspec((hidden2, latent_dim)),                      # W3
                wspec((1, latent_dim)),                            # b3
            ],
            out_specs=pl.BlockSpec((tb, latent_dim), lambda i: (i, 0)),
            compiler_params=pltpu.CompilerParams(
                dimension_semantics=("parallel",),     # megacore sharding on v7x
            ),
            cost_estimate=pl.CostEstimate(
                flops=flops, transcendentals=0, bytes_accessed=bytes_accessed),
        )(x_p, w1b, b1, w2b, b2, w3b, b3)

    try:
        # Single-buffer the never-changing weights/biases (halves their VMEM).
        out = _run(pl.Buffered(1))
    except Exception:
        # Fallback for jax versions where Buffered(1) isn't supported on this path.
        out = _run(None)

    return out[:B].astype(x.dtype)


def init_params(key, input_dim, latent_dim, layer_sizes=(512, 128)):
    """Deterministic init mimicking nn.Linear's U(-1/sqrt(fan_in), 1/sqrt(fan_in))."""
    sizes = [input_dim] + list(layer_sizes) + [latent_dim]
    params = []
    for i in range(1, len(sizes)):
        fan_in, fan_out = sizes[i - 1], sizes[i]
        key, kw, kb = jax.random.split(key, 3)
        bound = 1.0 / jnp.sqrt(float(fan_in))
        w = jax.random.uniform(kw, (fan_in, fan_out), jnp.float32, -bound, bound)
        b = jax.random.uniform(kb, (1, fan_out), jnp.float32, -bound, bound)
        params.append((w, b))
    return params


def reference_forward(x, params):
    h = x
    for i, (w, b) in enumerate(params):
        h = h @ w + b
        if i != len(params) - 1:
            h = jnp.where(h > 0, h, 0.2 * h)
    return h


if __name__ == "__main__":
    key = jax.random.PRNGKey(0)
    key, kx = jax.random.split(key)

    batch, input_dim, latent_dim = 8, 32, 16
    x = jax.random.normal(kx, (batch, input_dim), jnp.float32)
    params = init_params(key, input_dim, latent_dim, layer_sizes=(512, 128))

    out = dense_encoder_forward(x, params)
    out = jax.block_until_ready(out)

    ref = reference_forward(x, params)
    assert out.shape == (batch, latent_dim)
    # bf16 matmul inputs with f32 accumulation -> loose tolerance vs f32 reference.
    assert jnp.allclose(out, ref, atol=3e-2, rtol=3e-2), (
        float(jnp.max(jnp.abs(out - ref))))

    print("KERNEL_OK")
</pallas_src>

<mosaic_0001>
module attributes {stable_mosaic.version = 11 : i64} {
  func.func @_mlp_kernel(%arg0: i32, %arg1: memref<8x32xf32, #tpu.memory_space<vmem>>, %arg2: memref<32x512xbf16, #tpu.memory_space<vmem>>, %arg3: memref<1x512xf32, #tpu.memory_space<vmem>>, %arg4: memref<512x128xbf16, #tpu.memory_space<vmem>>, %arg5: memref<1x128xf32, #tpu.memory_space<vmem>>, %arg6: memref<128x16xbf16, #tpu.memory_space<vmem>>, %arg7: memref<1x16xf32, #tpu.memory_space<vmem>>, %arg8: memref<8x16xf32, #tpu.memory_space<vmem>>) attributes {dimension_semantics = [#tpu.dimension_semantics<parallel>], iteration_bounds = array<i64: 1>, scalar_prefetch = 0 : i64, scratch_operands = 0 : i64, tpu.core_type = #tpu.core_type<tc>, window_params = [{transform_indices = @transform_0, window_bounds = array<i64: 8, 32>}, {pipeline_mode = #tpu.pipeline_mode<synchronous>, transform_indices = @transform_1, window_bounds = array<i64: 32, 512>}, {pipeline_mode = #tpu.pipeline_mode<synchronous>, transform_indices = @transform_2, window_bounds = array<i64: 1, 512>}, {pipeline_mode = #tpu.pipeline_mode<synchronous>, transform_indices = @transform_3, window_bounds = array<i64: 512, 128>}, {pipeline_mode = #tpu.pipeline_mode<synchronous>, transform_indices = @transform_4, window_bounds = array<i64: 1, 128>}, {pipeline_mode = #tpu.pipeline_mode<synchronous>, transform_indices = @transform_5, window_bounds = array<i64: 128, 16>}, {pipeline_mode = #tpu.pipeline_mode<synchronous>, transform_indices = @transform_6, window_bounds = array<i64: 1, 16>}, {transform_indices = @transform_7, window_bounds = array<i64: 8, 16>}]} {
    %c0 = arith.constant 0 : index
    %c0_0 = arith.constant 0 : index
    %0 = vector.load %arg1[%c0, %c0_0] : memref<8x32xf32, #tpu.memory_space<vmem>>, vector<8x32xf32>
    %1 = arith.truncf %0 : vector<8x32xf32> to vector<8x32xbf16>
    %c0_1 = arith.constant 0 : index
    %c0_2 = arith.constant 0 : index
    %2 = vector.load %arg2[%c0_1, %c0_2] : memref<32x512xbf16, #tpu.memory_space<vmem>>, vector<32x512xbf16>
    %cst = arith.constant dense<0.000000e+00> : vector<8x512xf32>
    %3 = tpu.matmul %1, %2, %cst {dimension_numbers = #tpu.dot_dimension_numbers<[1], [0], [0], [1], [0, 0, 1, 1], [], []>} : vector<8x32xbf16>, vector<32x512xbf16>, vector<8x512xf32> -> vector<8x512xf32>
    %c0_3 = arith.constant 0 : index
    %c0_4 = arith.constant 0 : index
    %4 = vector.load %arg3[%c0_3, %c0_4] : memref<1x512xf32, #tpu.memory_space<vmem>>, vector<1x512xf32>
    %5 = vector.broadcast %4 : vector<1x512xf32> to vector<8x512xf32>
    %6 = arith.addf %3, %5 : vector<8x512xf32>
    %cst_5 = arith.constant 2.000000e-01 : f32
    %7 = vector.broadcast %cst_5 : f32 to vector<8x512xf32>
    %8 = arith.mulf %7, %6 : vector<8x512xf32>
    %9 = arith.maximumf %6, %8 : vector<8x512xf32>
    %10 = arith.truncf %9 : vector<8x512xf32> to vector<8x512xbf16>
    %c0_6 = arith.constant 0 : index
    %c0_7 = arith.constant 0 : index
    %11 = vector.load %arg4[%c0_6, %c0_7] : memref<512x128xbf16, #tpu.memory_space<vmem>>, vector<512x128xbf16>
    %cst_8 = arith.constant dense<0.000000e+00> : vector<8x128xf32>
    %12 = tpu.matmul %10, %11, %cst_8 {dimension_numbers = #tpu.dot_dimension_numbers<[1], [0], [0], [1], [0, 0, 1, 1], [], []>} : vector<8x512xbf16>, vector<512x128xbf16>, vector<8x128xf32> -> vector<8x128xf32>
    %c0_9 = arith.constant 0 : index
    %c0_10 = arith.constant 0 : index
    %13 = vector.load %arg5[%c0_9, %c0_10] : memref<1x128xf32, #tpu.memory_space<vmem>>, vector<1x128xf32>
    %14 = vector.broadcast %13 : vector<1x128xf32> to vector<8x128xf32>
    %15 = arith.addf %12, %14 : vector<8x128xf32>
    %cst_11 = arith.constant 2.000000e-01 : f32
    %16 = vector.broadcast %cst_11 : f32 to vector<8x128xf32>
    %17 = arith.mulf %16, %15 : vector<8x128xf32>
    %18 = arith.maximumf %15, %17 : vector<8x128xf32>
    %19 = arith.truncf %18 : vector<8x128xf32> to vector<8x128xbf16>
    %c0_12 = arith.constant 0 : index
    %c0_13 = arith.constant 0 : index
    %20 = vector.load %arg6[%c0_12, %c0_13] : memref<128x16xbf16, #tpu.memory_space<vmem>>, vector<128x16xbf16>
    %cst_14 = arith.constant dense<0.000000e+00> : vector<8x16xf32>
    %21 = tpu.matmul %19, %20, %cst_14 {dimension_numbers = #tpu.dot_dimension_numbers<[1], [0], [0], [1], [0, 0, 1, 1], [], []>} : vector<8x128xbf16>, vector<128x16xbf16>, vector<8x16xf32> -> vector<8x16xf32>
    %c0_15 = arith.constant 0 : index
    %c0_16 = arith.constant 0 : index
    %22 = vector.load %arg7[%c0_15, %c0_16] : memref<1x16xf32, #tpu.memory_space<vmem>>, vector<1x16xf32>
    %23 = vector.broadcast %22 : vector<1x16xf32> to vector<8x16xf32>
    %24 = arith.addf %21, %23 : vector<8x16xf32>
    %c0_17 = arith.constant 0 : index
    %c0_18 = arith.constant 0 : index
    %25 = vector.load %arg8[%c0_17, %c0_18] : memref<8x16xf32, #tpu.memory_space<vmem>>, vector<8x16xf32>
    tpu.vector_store %arg8[%c0_17, %c0_18], %24 {strides = array<i32>} : memref<8x16xf32, #tpu.memory_space<vmem>>, vector<8x16xf32>,
    return
  }
  func.func @transform_0(%arg0: i32) -> (i32, i32) {
    %c0_i32 = arith.constant 0 : i32
    %c0_i32_0 = arith.constant 0 : i32
    return %arg0, %c0_i32 : i32, i32
  }
  func.func @transform_1(%arg0: i32) -> (i32, i32) {
    %c0_i32 = arith.constant 0 : i32
    %c0_i32_0 = arith.constant 0 : i32
    %c0_i32_1 = arith.constant 0 : i32
    return %c0_i32, %c0_i32_0 : i32, i32
  }
  func.func @transform_2(%arg0: i32) -> (i32, i32) {
    %c0_i32 = arith.constant 0 : i32
    %c0_i32_0 = arith.constant 0 : i32
    %c0_i32_1 = arith.constant 0 : i32
    return %c0_i32, %c0_i32_0 : i32, i32
  }
  func.func @transform_3(%arg0: i32) -> (i32, i32) {
    %c0_i32 = arith.constant 0 : i32
    %c0_i32_0 = arith.constant 0 : i32
    %c0_i32_1 = arith.constant 0 : i32
    return %c0_i32, %c0_i32_0 : i32, i32
  }
  func.func @transform_4(%arg0: i32) -> (i32, i32) {
    %c0_i32 = arith.constant 0 : i32
    %c0_i32_0 = arith.constant 0 : i32
    %c0_i32_1 = arith.constant 0 : i32
    return %c0_i32, %c0_i32_0 : i32, i32
  }
  func.func @transform_5(%arg0: i32) -> (i32, i32) {
    %c0_i32 = arith.constant 0 : i32
    %c0_i32_0 = arith.constant 0 : i32
    %c0_i32_1 = arith.constant 0 : i32
    return %c0_i32, %c0_i32_0 : i32, i32
  }
  func.func @transform_6(%arg0: i32) -> (i32, i32) {
    %c0_i32 = arith.constant 0 : i32
    %c0_i32_0 = arith.constant 0 : i32
    %c0_i32_1 = arith.constant 0 : i32
    return %c0_i32, %c0_i32_0 : i32, i32
  }
  func.func @transform_7(%arg0: i32) -> (i32, i32) {
    %c0_i32 = arith.constant 0 : i32
    %c0_i32_0 = arith.constant 0 : i32
    return %arg0, %c0_i32 : i32, i32
  }
}

module attributes {stable_mosaic.version = 11 : i64} {
  func.func @_mlp_kernel(%arg0: i32, %arg1: memref<8x32xf32, #tpu.memory_space<vmem>>, %arg2: memref<32x512xbf16, #tpu.memory_space<vmem>>, %arg3: memref<1x512xf32, #tpu.memory_space<vmem>>, %arg4: memref<512x128xbf16, #tpu.memory_space<vmem>>, %arg5: memref<1x128xf32, #tpu.memory_space<vmem>>, %arg6: memref<128x16xbf16, #tpu.memory_space<vmem>>, %arg7: memref<1x16xf32, #tpu.memory_space<vmem>>, %arg8: memref<8x16xf32, #tpu.memory_space<vmem>>) attributes {dimension_semantics = [#tpu.dimension_semantics<parallel>], iteration_bounds = array<i64: 1>, scalar_prefetch = 0 : i64, scratch_operands = 0 : i64, tpu.core_type = #tpu.core_type<tc>, window_params = [{transform_indices = @transform_0, window_bounds = array<i64: 8, 32>}, {pipeline_mode = #tpu.pipeline_mode<synchronous>, transform_indices = @transform_1, window_bounds = array<i64: 32, 512>}, {pipeline_mode = #tpu.pipeline_mode<synchronous>, transform_indices = @transform_2, window_bounds = array<i64: 1, 512>}, {pipeline_mode = #tpu.pipeline_mode<synchronous>, transform_indices = @transform_3, window_bounds = array<i64: 512, 128>}, {pipeline_mode = #tpu.pipeline_mode<synchronous>, transform_indices = @transform_4, window_bounds = array<i64: 1, 128>}, {pipeline_mode = #tpu.pipeline_mode<synchronous>, transform_indices = @transform_5, window_bounds = array<i64: 128, 16>}, {pipeline_mode = #tpu.pipeline_mode<synchronous>, transform_indices = @transform_6, window_bounds = array<i64: 1, 16>}, {transform_indices = @transform_7, window_bounds = array<i64: 8, 16>}]} {
    %c0 = arith.constant 0 : index
    %c0_0 = arith.constant 0 : index
    %0 = vector.load %arg1[%c0, %c0_0] : memref<8x32xf32, #tpu.memory_space<vmem>>, vector<8x32xf32>
    %1 = arith.truncf %0 : vector<8x32xf32> to vector<8x32xbf16>
    %c0_1 = arith.constant 0 : index
    %c0_2 = arith.constant 0 : index
    %2 = vector.load %arg2[%c0_1, %c0_2] : memref<32x512xbf16, #tpu.memory_space<vmem>>, vector<32x512xbf16>
    %cst = arith.constant dense<0.000000e+00> : vector<8x512xf32>
    %3 = tpu.matmul %1, %2, %cst {dimension_numbers = #tpu.dot_dimension_numbers<[1], [0], [0], [1], [0, 0, 1, 1], [], []>} : vector<8x32xbf16>, vector<32x512xbf16>, vector<8x512xf32> -> vector<8x512xf32>
    %c0_3 = arith.constant 0 : index
    %c0_4 = arith.constant 0 : index
    %4 = vector.load %arg3[%c0_3, %c0_4] : memref<1x512xf32, #tpu.memory_space<vmem>>, vector<1x512xf32>
    %5 = vector.broadcast %4 : vector<1x512xf32> to vector<8x512xf32>
    %6 = arith.addf %3, %5 : vector<8x512xf32>
    %cst_5 = arith.constant 2.000000e-01 : f32
    %7 = vector.broadcast %cst_5 : f32 to vector<8x512xf32>
    %8 = arith.mulf %7, %6 : vector<8x512xf32>
    %9 = arith.maximumf %6, %8 : vector<8x512xf32>
    %10 = arith.truncf %9 : vector<8x512xf32> to vector<8x512xbf16>
    %c0_6 = arith.constant 0 : index
    %c0_7 = arith.constant 0 : index
    %11 = vector.load %arg4[%c0_6, %c0_7] : memref<512x128xbf16, #tpu.memory_space<vmem>>, vector<512x128xbf16>
    %cst_8 = arith.constant dense<0.000000e+00> : vector<8x128xf32>
    %12 = tpu.matmul %10, %11, %cst_8 {dimension_numbers = #tpu.dot_dimension_numbers<[1], [0], [0], [1], [0, 0, 1, 1], [], []>} : vector<8x512xbf16>, vector<512x128xbf16>, vector<8x128xf32> -> vector<8x128xf32>
    %c0_9 = arith.constant 0 : index
    %c0_10 = arith.constant 0 : index
    %13 = vector.load %arg5[%c0_9, %c0_10] : memref<1x128xf32, #tpu.memory_space<vmem>>, vector<1x128xf32>
    %14 = vector.broadcast %13 : vector<1x128xf32> to vector<8x128xf32>
    %15 = arith.addf %12, %14 : vector<8x128xf32>
    %cst_11 = arith.constant 2.000000e-01 : f32
    %16 = vector.broadcast %cst_11 : f32 to vector<8x128xf32>
    %17 = arith.mulf %16, %15 : vector<8x128xf32>
    %18 = arith.maximumf %15, %17 : vector<8x128xf32>
    %19 = arith.truncf %18 : vector<8x128xf32> to vector<8x128xbf16>
    %c0_12 = arith.constant 0 : index
    %c0_13 = arith.constant 0 : index
    %20 = vector.load %arg6[%c0_12, %c0_13] : memref<128x16xbf16, #tpu.memory_space<vmem>>, vector<128x16xbf16>
    %cst_14 = arith.constant dense<0.000000e+00> : vector<8x16xf32>
    %21 = tpu.matmul %19, %20, %cst_14 {dimension_numbers = #tpu.dot_dimension_numbers<[1], [0], [0], [1], [0, 0, 1, 1], [], []>} : vector<8x128xbf16>, vector<128x16xbf16>, vector<8x16xf32> -> vector<8x16xf32>
    %c0_15 = arith.constant 0 : index
    %c0_16 = arith.constant 0 : index
    %22 = vector.load %arg7[%c0_15, %c0_16] : memref<1x16xf32, #tpu.memory_space<vmem>>, vector<1x16xf32>
    %23 = vector.broadcast %22 : vector<1x16xf32> to vector<8x16xf32>
    %24 = arith.addf %21, %23 : vector<8x16xf32>
    %c0_17 = arith.constant 0 : index
    %c0_18 = arith.constant 0 : index
    %25 = vector.load %arg8[%c0_17, %c0_18] : memref<8x16xf32, #tpu.memory_space<vmem>>, vector<8x16xf32>
    tpu.vector_store %arg8[%c0_17, %c0_18], %24 {strides = array<i32>} : memref<8x16xf32, #tpu.memory_space<vmem>>, vector<8x16xf32>,
    return
  }
  func.func @transform_0(%arg0: i32) -> (i32, i32) {
    %c0_i32 = arith.constant 0 : i32
    %c0_i32_0 = arith.constant 0 : i32
    return %arg0, %c0_i32 : i32, i32
  }
  func.func @transform_1(%arg0: i32) -> (i32, i32) {
    %c0_i32 = arith.constant 0 : i32
    %c0_i32_0 = arith.constant 0 : i32
    %c0_i32_1 = arith.constant 0 : i32
    return %c0_i32, %c0_i32_0 : i32, i32
  }
  func.func @transform_2(%arg0: i32) -> (i32, i32) {
    %c0_i32 = arith.constant 0 : i32
    %c0_i32_0 = arith.constant 0 : i32
    %c0_i32_1 = arith.constant 0 : i32
    return %c0_i32, %c0_i32_0 : i32, i32
  }
  func.func @transform_3(%arg0: i32) -> (i32, i32) {
    %c0_i32 = arith.constant 0 : i32
    %c0_i32_0 = arith.constant 0 : i32
    %c0_i32_1 = arith.constant 0 : i32
    return %c0_i32, %c0_i32_0 : i32, i32
  }
  func.func @transform_4(%arg0: i32) -> (i32, i32) {
    %c0_i32 = arith.constant 0 : i32
    %c0_i32_0 = arith.constant 0 : i32
    %c0_i32_1 = arith.constant 0 : i32
    return %c0_i32, %c0_i32_0 : i32, i32
  }
  func.func @transform_5(%arg0: i32) -> (i32, i32) {
    %c0_i32 = arith.constant 0 : i32
    %c0_i32_0 = arith.constant 0 : i32
    %c0_i32_1 = arith.constant 0 : i32
    return %c0_i32, %c0_i32_0 : i32, i32
  }
  func.func @transform_6(%arg0: i32) -> (i32, i32) {
    %c0_i32 = arith.constant 0 : i32
    %c0_i32_0 = arith.constant 0 : i32
    %c0_i32_1 = arith.constant 0 : i32
    return %c0_i32, %c0_i32_0 : i32, i32
  }
  func.func @transform_7(%arg0: i32) -> (i32, i32) {
    %c0_i32 = arith.constant 0 : i32
    %c0_i32_0 = arith.constant 0 : i32
    return %arg0, %c0_i32 : i32, i32
  }
}

</mosaic_0001>

<llo_original>
// kernel: tpu_custom_call.1
$region0: #{tpu_custom_call.1}
  #allocation0 [shape = 'u32[]', space=smem, size = 0x4, offset = 0x4, fixed_abs, tag = 'smem constant byte address 0x4 - core index']
  #allocation1 [shape = 'u32[72,128]{1,0:T(1,128)}', space=vmem, size = 0x9000, scoped, tag = 'internal scratch']
  %s0 = inlined_call_operand.vmem [shape: f32[8,32], index: 0, kind: input, shape index: {}]
  %s1 = inlined_call_operand.vmem [shape: bf16[32,512], index: 1, kind: input, shape index: {}]
  %s2 = inlined_call_operand.hbm [shape: f32[1,512], index: 2, kind: input, shape index: {}]
  %s3 = inlined_call_operand.hbm [shape: bf16[512,128], index: 3, kind: input, shape index: {}]
  %s4 = inlined_call_operand.vmem [shape: f32[1,128], index: 4, kind: input, shape index: {}]
  %s5 = inlined_call_operand.vmem [shape: bf16[128,16], index: 5, kind: input, shape index: {}]
  %s6 = inlined_call_operand.vmem [shape: f32[1,16], index: 6, kind: input, shape index: {}]
  %s7 = inlined_call_operand.hbm [shape: f32[8,16], index: 7, kind: output, shape index: {}]
  %s8 = sld [smem:[#allocation0]]
  $region46: #{tpu_custom_call.1} parent=0
    _
  %s10 = ssub.s32 1, %s8
  %s11 = scalar_select 0, %s10, %s8
  $region1: #{tpu_custom_call.1} parent=0
    #allocation2 [shape = 'u8[2048]{0}', space=vmem, size = 0x800, scoped, tag = 'input window, operand 2, single buffered']
    #allocation3 [shape = 's32[1]{0}', space=sflag, size = 0x4, scoped, tag = 'scoped memory for tpu_custom_call.1']
    #allocation4 [shape = 's32[1]{0}', space=sflag, size = 0x4, scoped, tag = 'scoped memory for tpu_custom_call.1']
    #allocation5 [shape = 'u8[131072]{0}', space=vmem, size = 0x20000, scoped, tag = 'input window, operand 3, single buffered']
    #allocation6 [shape = 's32[1]{0}', space=sflag, size = 0x4, scoped, tag = 'scoped memory for tpu_custom_call.1']
    #allocation7 [shape = 'u8[4096]{0}', space=vmem, size = 0x1000, scoped, tag = 'output window, operand 0, single buffered']
    %12 = vsyncpa [#allocation3], 0
    %13 = vsyncpa [#allocation6], 0
    %14 = vsyncpa [#allocation4], 0
    // Predicated region
    $region2: #{tpu_custom_call.1} parent=1 // pred_check
      _
    $region3: #{tpu_custom_call.1} parent=1 // pred_check_branch
      %16 = sbr.rel (0) target = $region5
    $region4: #{tpu_custom_call.1} parent=1 // pred_region
      _
    $region5: #{tpu_custom_call.1} parent=1 // pred_fallthru
      _
    // Predicated region
    $region6: #{tpu_custom_call.1} parent=1 // pred_check
      _
    $region7: #{tpu_custom_call.1} parent=1 // pred_check_branch
      %18 = sbr.rel (0) target = $region9
    $region8: #{tpu_custom_call.1} parent=1 // pred_region
      _
    $region9: #{tpu_custom_call.1} parent=1 // pred_fallthru
      _
    // Predicated region
    $region10: #{tpu_custom_call.1} parent=1 // pred_check
      _
    $region11: #{tpu_custom_call.1} parent=1 // pred_check_branch
      %20 = sbr.rel (0) target = $region13
    $region12: #{tpu_custom_call.1} parent=1 // pred_region
      %22 = vsyncadd [#allocation3], 0
      %s24 = sshll.u32 %s2, 4
      %s25 = int_to_ptr.hbm [resolvable:$true] %s24
      %s26 = sshll.u32 [#allocation2], 4
      %s27 = int_to_ptr.vmem [resolvable:$true] %s26
      %29 = dma.hbm_to_vmem [thread:$0]  %s25, 64, %s27, [#allocation3]
    $region13: #{tpu_custom_call.1} parent=1 // pred_fallthru
      _
    // Predicated region
    $region14: #{tpu_custom_call.1} parent=1 // pred_check
      _
    $region15: #{tpu_custom_call.1} parent=1 // pred_check_branch
      %31 = sbr.rel (0) target = $region17
    $region16: #{tpu_custom_call.1} parent=1 // pred_region
      %33 = vsyncadd [#allocation6], 0
      %s34 = sshll.u32 %s3, 4
      %s35 = int_to_ptr.hbm [resolvable:$true] %s34
      %s36 = sshll.u32 [#allocation5], 4
      %s37 = int_to_ptr.vmem [resolvable:$true] %s36
      %42 = dma.hbm_to_vmem [thread:$0]  %s35, 4096, %s37, [#allocation6], 64, 64, 4
    $region17: #{tpu_custom_call.1} parent=1 // pred_fallthru
      _
    // Predicated region
    $region18: #{tpu_custom_call.1} parent=1 // pred_check
      _
    $region19: #{tpu_custom_call.1} parent=1 // pred_check_branch
      %44 = sbr.rel (0) target = $region21
    $region20: #{tpu_custom_call.1} parent=1 // pred_region
      _
    $region21: #{tpu_custom_call.1} parent=1 // pred_fallthru
      _
    // Predicated region
    $region22: #{tpu_custom_call.1} parent=1 // pred_check
      _
    $region23: #{tpu_custom_call.1} parent=1 // pred_check_branch
      %46 = sbr.rel (0) target = $region25
    $region24: #{tpu_custom_call.1} parent=1 // pred_region
      _
    $region25: #{tpu_custom_call.1} parent=1 // pred_fallthru
      _
    // Predicated region
    $region26: #{tpu_custom_call.1} parent=1 // pred_check
      _
    $region27: #{tpu_custom_call.1} parent=1 // pred_check_branch
      %48 = sbr.rel (0) target = $region29
    $region28: #{tpu_custom_call.1} parent=1 // pred_region
      _
    $region29: #{tpu_custom_call.1} parent=1 // pred_fallthru
      _
    // Predicated region
    $region30: #{tpu_custom_call.1} parent=1 // pred_check
      _
    $region31: #{tpu_custom_call.1} parent=1 // pred_check_branch
      %50 = sbr.rel (0) target = $region33
    $region32: #{tpu_custom_call.1} parent=1 // pred_region
      %52 = dma.done [#allocation3], 64
    $region33: #{tpu_custom_call.1} parent=1 // pred_fallthru
      _
    // Predicated region
    $region34: #{tpu_custom_call.1} parent=1 // pred_check
      _
    $region35: #{tpu_custom_call.1} parent=1 // pred_check_branch
      %54 = sbr.rel (0) target = $region37
    $region36: #{tpu_custom_call.1} parent=1 // pred_region
      %56 = dma.done [#allocation6], 4096
    $region37: #{tpu_custom_call.1} parent=1 // pred_fallthru
      _
    %v58 = vld [vmem:[%s0] sm:$0xff]
    %v59 = vpack.c.bf16 %v58, %v58
    %v60 = vld [vmem:[%s1] sm:$0xff]
    %v61 = vld [vmem:[%s1 + $0x8] sm:$0xff]
    %v62 = vld [vmem:[%s1 + $0x10] sm:$0xff]
    %v63 = vld [vmem:[%s1 + $0x18] sm:$0xff]
    %v64 = vld [vmem:[%s1 + $0x20] sm:$0xff]
    %v65 = vld [vmem:[%s1 + $0x28] sm:$0xff]
    %v66 = vld [vmem:[%s1 + $0x30] sm:$0xff]
    %v67 = vld [vmem:[%s1 + $0x38] sm:$0xff]
    %v68 = vld [vmem:[#allocation2] sm:$0xf]
    %v70 = vperm.slane %v68, 0
    %v71 = vperm.slane %v68, 1
    %v72 = vperm.slane %v68, 2
    %v73 = vperm.slane %v68, 3
    %v86 = vunpack.c.l.b16 %v60
    %v87 = vunpack.c.h.b16 %v60
    %v88 = vunpack.c.l.b16 %v61
    %v89 = vunpack.c.h.b16 %v61
    %v90 = vunpack.c.l.b16 %v62
    %v91 = vunpack.c.h.b16 %v62
    %v92 = vunpack.c.l.b16 %v63
    %v93 = vunpack.c.h.b16 %v63
    %v94 = vunpack.c.l.b16 %v64
    %v95 = vunpack.c.h.b16 %v64
    %v96 = vunpack.c.l.b16 %v65
    %v97 = vunpack.c.h.b16 %v65
    %v98 = vunpack.c.l.b16 %v66
    %v99 = vunpack.c.h.b16 %v66
    %v100 = vunpack.c.l.b16 %v67
    %v101 = vunpack.c.h.b16 %v67
    %v102 = vpack.c.b16 %v90, %v86
    %v103 = vpack.c.b16 %v91, %v87
    %v104 = vpack.c.b16 %v92, %v88
    %v105 = vpack.c.b16 %v93, %v89
    %v106 = vpack.c.b16 %v98, %v94
    %v107 = vpack.c.b16 %v99, %v95
    %v108 = vpack.c.b16 %v100, %v96
    %v109 = vpack.c.b16 %v101, %v97
    %vm118 = vcmask 261120
    %v120 = vsel %vm118, %v59, 0
    %122 = vmatpush.bf16.msra.mxu0 0
    %123 = vmatpush.bf16.msra.mxu0 0
    %124 = vmatpush.bf16.msra.mxu0 0
    %125 = vmatpush.bf16.msra.mxu0 0
    %126 = vmatpush.bf16.msra.mxu0 0
    %127 = vmatpush.bf16.msra.mxu0 0
    %128 = vmatpush.bf16.msra.mxu0 %v106
    %129 = vmatpush.bf16.msra.mxu0 %v102
    %130 = vmatmul.bf16.gmra.mxu0 %v120
    %v131 = vpop.f32.mrf.mxu0
    %v132 = vadd.f32 %v70, %v131
    %v133 = vpop.f32.mrf.mxu0
    %134 = vdwg.mxu0
    %135 = vmatpush.bf16.msra.mxu0 0
    %136 = vmatpush.bf16.msra.mxu0 0
    %137 = vmatpush.bf16.msra.mxu0 0
    %138 = vmatpush.bf16.msra.mxu0 0
    %139 = vmatpush.bf16.msra.mxu0 0
    %140 = vmatpush.bf16.msra.mxu0 0
    %141 = vmatpush.bf16.msra.mxu0 %v107
    %142 = vmatpush.bf16.msra.mxu0 %v103
    %143 = vmatmul.bf16.gmra.mxu0 %v120
    %v144 = vpop.f32.mrf.mxu0
    %v145 = vadd.f32 %v71, %v144
    %v146 = vpop.f32.mrf.mxu0
    %147 = vdwg.mxu0
    %148 = vmatpush.bf16.msra.mxu0 0
    %149 = vmatpush.bf16.msra.mxu0 0
    %150 = vmatpush.bf16.msra.mxu0 0
    %151 = vmatpush.bf16.msra.mxu0 0
    %152 = vmatpush.bf16.msra.mxu0 0
    %153 = vmatpush.bf16.msra.mxu0 0
    %154 = vmatpush.bf16.msra.mxu0 %v108
    %155 = vmatpush.bf16.msra.mxu0 %v104
    %156 = vmatmul.bf16.gmra.mxu0 %v120
    %v157 = vpop.f32.mrf.mxu0
    %v158 = vadd.f32 %v72, %v157
    %v159 = vpop.f32.mrf.mxu0
    %160 = vdwg.mxu0
    %161 = vmatpush.bf16.msra.mxu0 0
    %162 = vmatpush.bf16.msra.mxu0 0
    %163 = vmatpush.bf16.msra.mxu0 0
    %164 = vmatpush.bf16.msra.mxu0 0
    %165 = vmatpush.bf16.msra.mxu0 0
    %166 = vmatpush.bf16.msra.mxu0 0
    %167 = vmatpush.bf16.msra.mxu0 %v109
    %168 = vmatpush.bf16.msra.mxu0 %v105
    %169 = vmatmul.bf16.gmra.mxu0 %v120
    %v170 = vpop.f32.mrf.mxu0
    %v171 = vadd.f32 %v73, %v170
    %v172 = vpop.f32.mrf.mxu0
    %173 = vdwg.mxu0
    %v174 = vmul.f32 %v132, 0.2
    %v175 = vmul.f32 %v145, 0.2
    %v176 = vmul.f32 %v158, 0.2
    %v177 = vmul.f32 %v171, 0.2
    %v178 = vmax.f32 %v132, %v174
    %v179 = vmax.f32 %v145, %v175
    %v180 = vmax.f32 %v158, %v176
    %v181 = vmax.f32 %v171, %v177
    %v182 = vpack.c.bf16 %v178, %v178
    %v183 = vpack.c.bf16 %v179, %v179
    %v184 = vpack.c.bf16 %v180, %v180
    %v185 = vpack.c.bf16 %v181, %v181
    %v186 = vld [vmem:[#allocation5] sm:$0xf]
    %v187 = vld [vmem:[#allocation5 + $0x4] sm:$0xf]
    %v188 = vld [vmem:[#allocation5 + $0x8] sm:$0xf]
    %v189 = vld [vmem:[#allocation5 + $0xc] sm:$0xf]
    %v190 = vld [vmem:[#allocation5 + $0x10] sm:$0xf]
    %v191 = vld [vmem:[#allocation5 + $0x14] sm:$0xf]
    %v192 = vld [vmem:[#allocation5 + $0x18] sm:$0xf]
    %v193 = vld [vmem:[#allocation5 + $0x1c] sm:$0xf]
    %v194 = vld [vmem:[#allocation5 + $0x20] sm:$0xf]
    %v195 = vld [vmem:[#allocation5 + $0x24] sm:$0xf]
    %v196 = vld [vmem:[#allocation5 + $0x28] sm:$0xf]
    %v197 = vld [vmem:[#allocation5 + $0x2c] sm:$0xf]
    %v198 = vld [vmem:[#allocation5 + $0x30] sm:$0xf]
    %v199 = vld [vmem:[#allocation5 + $0x34] sm:$0xf]
    %v200 = vld [vmem:[#allocation5 + $0x38] sm:$0xf]
    %v201 = vld [vmem:[#allocation5 + $0x3c] sm:$0xf]
    %v202 = vld [vmem:[#allocation5 + $0x40] sm:$0xf]
    %v203 = vld [vmem:[#allocation5 + $0x44] sm:$0xf]
    %v204 = vld [vmem:[#allocation5 + $0x48] sm:$0xf]
    %v205 = vld [vmem:[#allocation5 + $0x4c] sm:$0xf]
    %v206 = vld [vmem:[#allocation5 + $0x50] sm:$0xf]
    %v207 = vld [vmem:[#allocation5 + $0x54] sm:$0xf]
    %v208 = vld [vmem:[#allocation5 + $0x58] sm:$0xf]
    %v209 = vld [vmem:[#allocation5 + $0x5c] sm:$0xf]
    %v210 = vld [vmem:[#allocation5 + $0x60] sm:$0xf]
    %v211 = vld [vmem:[#allocation5 + $0x64] sm:$0xf]
    %v212 = vld [vmem:[#allocation5 + $0x68] sm:$0xf]
    %v213 = vld [vmem:[#allocation5 + $0x6c] sm:$0xf]
    %v214 = vld [vmem:[#allocation5 + $0x70] sm:$0xf]
    %v215 = vld [vmem:[#allocation5 + $0x74] sm:$0xf]
    %v216 = vld [vmem:[#allocation5 + $0x78] sm:$0xf]
    %v217 = vld [vmem:[#allocation5 + $0x7c] sm:$0xf]
    %v218 = vld [vmem:[#allocation5 + $0x80] sm:$0xf]
    %v219 = vld [vmem:[#allocation5 + $0x84] sm:$0xf]
    %v220 = vld [vmem:[#allocation5 + $0x88] sm:$0xf]
    %v221 = vld [vmem:[#allocation5 + $0x8c] sm:$0xf]
    %v222 = vld [vmem:[#allocation5 + $0x90] sm:$0xf]
    %v223 = vld [vmem:[#allocation5 + $0x94] sm:$0xf]
    %v224 = vld [vmem:[#allocation5 + $0x98] sm:$0xf]
    %v225 = vld [vmem:[#allocation5 + $0x9c] sm:$0xf]
    %v226 = vld [vmem:[#allocation5 + $0xa0] sm:$0xf]
    %v227 = vld [vmem:[#allocation5 + $0xa4] sm:$0xf]
    %v228 = vld [vmem:[#allocation5 + $0xa8] sm:$0xf]
    %v229 = vld [vmem:[#allocation5 + $0xac] sm:$0xf]
    %v230 = vld [vmem:[#allocation5 + $0xb0] sm:$0xf]
    %v231 = vld [vmem:[#allocation5 + $0xb4] sm:$0xf]
    %v232 = vld [vmem:[#allocation5 + $0xb8] sm:$0xf]
    %v233 = vld [vmem:[#allocation5 + $0xbc] sm:$0xf]
    %v234 = vld [vmem:[#allocation5 + $0xc0] sm:$0xf]
    %v235 = vld [vmem:[#allocation5 + $0xc4] sm:$0xf]
    %v236 = vld [vmem:[#allocation5 + $0xc8] sm:$0xf]
    %v237 = vld [vmem:[#allocation5 + $0xcc] sm:$0xf]
    %v238 = vld [vmem:[#allocation5 + $0xd0] sm:$0xf]
    %v239 = vld [vmem:[#allocation5 + $0xd4] sm:$0xf]
    %v240 = vld [vmem:[#allocation5 + $0xd8] sm:$0xf]
    %v241 = vld [vmem:[#allocation5 + $0xdc] sm:$0xf]
    %v242 = vld [vmem:[#allocation5 + $0xe0] sm:$0xf]
    %v243 = vld [vmem:[#allocation5 + $0xe4] sm:$0xf]
    %v244 = vld [vmem:[#allocation5 + $0xe8] sm:$0xf]
    %v245 = vld [vmem:[#allocation5 + $0xec] sm:$0xf]
    %v246 = vld [vmem:[#allocation5 + $0xf0] sm:$0xf]
    %v247 = vld [vmem:[#allocation5 + $0xf4] sm:$0xf]
    %v248 = vld [vmem:[#allocation5 + $0xf8] sm:$0xf]
    %v249 = vld [vmem:[#allocation5 + $0xfc] sm:$0xf]
    %v250 = vld [vmem:[%s4] sm:$0x1]
    %v252 = vperm.slane %v250, 0
    %v318 = vunpack.c.l.b16 %v186
    %v319 = vunpack.c.l.b16 %v187
    %v320 = vunpack.c.l.b16 %v188
    %v321 = vunpack.c.l.b16 %v189
    %v322 = vunpack.c.l.b16 %v190
    %v323 = vunpack.c.l.b16 %v191
    %v324 = vunpack.c.l.b16 %v192
    %v325 = vunpack.c.l.b16 %v193
    %v326 = vunpack.c.l.b16 %v194
    %v327 = vunpack.c.l.b16 %v195
    %v328 = vunpack.c.l.b16 %v196
    %v329 = vunpack.c.l.b16 %v197
    %v330 = vunpack.c.l.b16 %v198
    %v331 = vunpack.c.l.b16 %v199
    %v332 = vunpack.c.l.b16 %v200
    %v333 = vunpack.c.l.b16 %v201
    %v334 = vunpack.c.l.b16 %v202
    %v335 = vunpack.c.l.b16 %v203
    %v336 = vunpack.c.l.b16 %v204
    %v337 = vunpack.c.l.b16 %v205
    %v338 = vunpack.c.l.b16 %v206
    %v339 = vunpack.c.l.b16 %v207
    %v340 = vunpack.c.l.b16 %v208
    %v341 = vunpack.c.l.b16 %v209
    %v342 = vunpack.c.l.b16 %v210
    %v343 = vunpack.c.l.b16 %v211
    %v344 = vunpack.c.l.b16 %v212
    %v345 = vunpack.c.l.b16 %v213
    %v346 = vunpack.c.l.b16 %v214
    %v347 = vunpack.c.l.b16 %v215
    %v348 = vunpack.c.l.b16 %v216
    %v349 = vunpack.c.l.b16 %v217
    %v350 = vunpack.c.l.b16 %v218
    %v351 = vunpack.c.l.b16 %v219
    %v352 = vunpack.c.l.b16 %v220
    %v353 = vunpack.c.l.b16 %v221
    %v354 = vunpack.c.l.b16 %v222
    %v355 = vunpack.c.l.b16 %v223
    %v356 = vunpack.c.l.b16 %v224
    %v357 = vunpack.c.l.b16 %v225
    %v358 = vunpack.c.l.b16 %v226
    %v359 = vunpack.c.l.b16 %v227
    %v360 = vunpack.c.l.b16 %v228
    %v361 = vunpack.c.l.b16 %v229
    %v362 = vunpack.c.l.b16 %v230
    %v363 = vunpack.c.l.b16 %v231
    %v364 = vunpack.c.l.b16 %v232
    %v365 = vunpack.c.l.b16 %v233
    %v366 = vunpack.c.l.b16 %v234
    %v367 = vunpack.c.l.b16 %v235
    %v368 = vunpack.c.l.b16 %v236
    %v369 = vunpack.c.l.b16 %v237
    %v370 = vunpack.c.l.b16 %v238
    %v371 = vunpack.c.l.b16 %v239
    %v372 = vunpack.c.l.b16 %v240
    %v373 = vunpack.c.l.b16 %v241
    %v374 = vunpack.c.l.b16 %v242
    %v375 = vunpack.c.l.b16 %v243
    %v376 = vunpack.c.l.b16 %v244
    %v377 = vunpack.c.l.b16 %v245
    %v378 = vunpack.c.l.b16 %v246
    %v379 = vunpack.c.l.b16 %v247
    %v380 = vunpack.c.l.b16 %v248
    %v381 = vunpack.c.l.b16 %v249
    %v382 = vpack.c.b16 %v319, %v318
    %v383 = vpack.c.b16 %v321, %v320
    %v384 = vpack.c.b16 %v323, %v322
    %v385 = vpack.c.b16 %v325, %v324
    %v386 = vpack.c.b16 %v327, %v326
    %v387 = vpack.c.b16 %v329, %v328
    %v388 = vpack.c.b16 %v331, %v330
    %v389 = vpack.c.b16 %v333, %v332
    %v390 = vpack.c.b16 %v335, %v334
    %v391 = vpack.c.b16 %v337, %v336
    %v392 = vpack.c.b16 %v339, %v338
    %v393 = vpack.c.b16 %v341, %v340
    %v394 = vpack.c.b16 %v343, %v342
    %v395 = vpack.c.b16 %v345, %v344
    %v396 = vpack.c.b16 %v347, %v346
    %v397 = vpack.c.b16 %v349, %v348
    %v398 = vpack.c.b16 %v351, %v350
    %v399 = vpack.c.b16 %v353, %v352
    %v400 = vpack.c.b16 %v355, %v354
    %v401 = vpack.c.b16 %v357, %v356
    %v402 = vpack.c.b16 %v359, %v358
    %v403 = vpack.c.b16 %v361, %v360
    %v404 = vpack.c.b16 %v363, %v362
    %v405 = vpack.c.b16 %v365, %v364
    %v406 = vpack.c.b16 %v367, %v366
    %v407 = vpack.c.b16 %v369, %v368
    %v408 = vpack.c.b16 %v371, %v370
    %v409 = vpack.c.b16 %v373, %v372
    %v410 = vpack.c.b16 %v375, %v374
    %v411 = vpack.c.b16 %v377, %v376
    %v412 = vpack.c.b16 %v379, %v378
    %v413 = vpack.c.b16 %v381, %v380
    %446 = vmatpush.bf16.msra.mxu0 %v389
    %447 = vmatpush.bf16.msra.mxu0 %v388
    %448 = vmatpush.bf16.msra.mxu0 %v387
    %449 = vmatpush.bf16.msra.mxu0 %v386
    %450 = vmatpush.bf16.msra.mxu0 %v385
    %451 = vmatpush.bf16.msra.mxu0 %v384
    %452 = vmatpush.bf16.msra.mxu0 %v383
    %453 = vmatpush.bf16.msra.mxu0 %v382
    %454 = vmatmul.bf16.gmra.mxu0 %v182
    %v455 = vpop.f32.mrf.mxu0
    %v456 = vadd.f32 %v252, %v455
    %v457 = vpop.f32.mrf.mxu0
    %458 = vdwg.mxu0
    %459 = vmatpush.bf16.msra.mxu0 %v397
    %460 = vmatpush.bf16.msra.mxu0 %v396
    %461 = vmatpush.bf16.msra.mxu0 %v395
    %462 = vmatpush.bf16.msra.mxu0 %v394
    %463 = vmatpush.bf16.msra.mxu0 %v393
    %464 = vmatpush.bf16.msra.mxu0 %v392
    %465 = vmatpush.bf16.msra.mxu0 %v391
    %466 = vmatpush.bf16.msra.mxu0 %v390
    %467 = vmatmul.bf16.gmra.mxu0 %v183
    %v468 = vpop.f32.mrf.mxu0
    %v469 = vadd.f32 %v456, %v468
    %v470 = vpop.f32.mrf.mxu0
    %471 = vdwg.mxu0
    %472 = vmatpush.bf16.msra.mxu0 %v405
    %473 = vmatpush.bf16.msra.mxu0 %v404
    %474 = vmatpush.bf16.msra.mxu0 %v403
    %475 = vmatpush.bf16.msra.mxu0 %v402
    %476 = vmatpush.bf16.msra.mxu0 %v401
    %477 = vmatpush.bf16.msra.mxu0 %v400
    %478 = vmatpush.bf16.msra.mxu0 %v399
    %479 = vmatpush.bf16.msra.mxu0 %v398
    %480 = vmatmul.bf16.gmra.mxu0 %v184
    %v481 = vpop.f32.mrf.mxu0
    %v482 = vadd.f32 %v469, %v481
    %v483 = vpop.f32.mrf.mxu0
    %484 = vdwg.mxu0
    %485 = vmatpush.bf16.msra.mxu0 %v413
    %486 = vmatpush.bf16.msra.mxu0 %v412
    %487 = vmatpush.bf16.msra.mxu0 %v411
    %488 = vmatpush.bf16.msra.mxu0 %v410
    %489 = vmatpush.bf16.msra.mxu0 %v409
    %490 = vmatpush.bf16.msra.mxu0 %v408
    %491 = vmatpush.bf16.msra.mxu0 %v407
    %492 = vmatpush.bf16.msra.mxu0 %v406
    %493 = vmatmul.bf16.gmra.mxu0 %v185
    %v494 = vpop.f32.mrf.mxu0
    %v495 = vadd.f32 %v482, %v494
    %v496 = vpop.f32.mrf.mxu0
    %497 = vdwg.mxu0
    %v498 = vmul.f32 %v495, 0.2
    %v499 = vmax.f32 %v495, %v498
    %v500 = vpack.c.bf16 %v499, %v499
    %v501 = vld [vmem:[%s5] sm:$0xf]
    %v502 = vld [vmem:[%s5 + $0x4] sm:$0xf]
    %v503 = vld [vmem:[%s5 + $0x8] sm:$0xf]
    %v504 = vld [vmem:[%s5 + $0xc] sm:$0xf]
    %v505 = vld [vmem:[%s5 + $0x10] sm:$0xf]
    %v506 = vld [vmem:[%s5 + $0x14] sm:$0xf]
    %v507 = vld [vmem:[%s5 + $0x18] sm:$0xf]
    %v508 = vld [vmem:[%s5 + $0x1c] sm:$0xf]
    %v509 = vld [vmem:[%s5 + $0x20] sm:$0xf]
    %v510 = vld [vmem:[%s5 + $0x24] sm:$0xf]
    %v511 = vld [vmem:[%s5 + $0x28] sm:$0xf]
    %v512 = vld [vmem:[%s5 + $0x2c] sm:$0xf]
    %v513 = vld [vmem:[%s5 + $0x30] sm:$0xf]
    %v514 = vld [vmem:[%s5 + $0x34] sm:$0xf]
    %v515 = vld [vmem:[%s5 + $0x38] sm:$0xf]
    %v516 = vld [vmem:[%s5 + $0x3c] sm:$0xf]
    %v517 = vld [vmem:[%s6] sm:$0x1]
    %v519 = vperm.slane %v517, 0
    %v537 = vunpack.c.l.b16 %v501
    %v538 = vunpack.c.l.b16 %v502
    %v539 = vunpack.c.l.b16 %v503
    %v540 = vunpack.c.l.b16 %v504
    %v541 = vunpack.c.l.b16 %v505
    %v542 = vunpack.c.l.b16 %v506
    %v543 = vunpack.c.l.b16 %v507
    %v544 = vunpack.c.l.b16 %v508
    %v545 = vunpack.c.l.b16 %v509
    %v546 = vunpack.c.l.b16 %v510
    %v547 = vunpack.c.l.b16 %v511
    %v548 = vunpack.c.l.b16 %v512
    %v549 = vunpack.c.l.b16 %v513
    %v550 = vunpack.c.l.b16 %v514
    %v551 = vunpack.c.l.b16 %v515
    %v552 = vunpack.c.l.b16 %v516
    %v553 = vpack.c.b16 %v538, %v537
    %v554 = vpack.c.b16 %v540, %v539
    %v555 = vpack.c.b16 %v542, %v541
    %v556 = vpack.c.b16 %v544, %v543
    %v557 = vpack.c.b16 %v546, %v545
    %v558 = vpack.c.b16 %v548, %v547
    %v559 = vpack.c.b16 %v550, %v549
    %v560 = vpack.c.b16 %v552, %v551
    %569 = vmatpush.bf16.msra.mxu0 %v560
    %570 = vmatpush.bf16.msra.mxu0 %v559
    %571 = vmatpush.bf16.msra.mxu0 %v558
    %572 = vmatpush.bf16.msra.mxu0 %v557
    %573 = vmatpush.bf16.msra.mxu0 %v556
    %574 = vmatpush.bf16.msra.mxu0 %v555
    %575 = vmatpush.bf16.msra.mxu0 %v554
    %576 = vmatpush.bf16.msra.mxu0 %v553
    %577 = vmatmul.bf16.gmra.mxu0 %v500
    %v578 = vpop.f32.mrf.mxu0
    %v579 = vadd.f32 %v519, %v578
    %v580 = vpop.f32.mrf.mxu0
    %581 = vdwg.mxu0
    %vm582 = vcmask 130048
    %583 = vst.msk [vmem:[#allocation7] sm:$0xff] %vm582, %v579
    // Predicated region
    $region38: #{tpu_custom_call.1} parent=1 // pred_check
      _
    $region39: #{tpu_custom_call.1} parent=1 // pred_check_branch
      %585 = sbr.rel (0) target = $region41
    $region40: #{tpu_custom_call.1} parent=1 // pred_region
      %587 = vsyncadd [#allocation4], 0
      %s589 = sshll.u32 [#allocation7], 4
      %s590 = int_to_ptr.vmem [resolvable:$true] %s589
      %s591 = sshll.u32 %s7, 4
      %s592 = int_to_ptr.hbm [resolvable:$true] %s591
      %594 = dma.vmem_to_hbm [thread:$0]  %s590, 128, %s592, [#allocation4]
    $region41: #{tpu_custom_call.1} parent=1 // pred_fallthru
      _
    // Predicated region
    $region42: #{tpu_custom_call.1} parent=1 // pred_check
      _
    $region43: #{tpu_custom_call.1} parent=1 // pred_check_branch
      %596 = sbr.rel (0) target = $region45
    $region44: #{tpu_custom_call.1} parent=1 // pred_region
      %598 = dma.done [#allocation4], 128
    $region45: #{tpu_custom_call.1} parent=1 // pred_fallthru
      _
    %599 = vsyncpa [#allocation3], 1
    %600 = vsyncpa [#allocation6], 1
    %601 = vsyncpa [#allocation4], 1

// kernel: tpu_custom_call.1
$region0: #{tpu_custom_call.1}
  #allocation0 [shape = 'u32[]', space=smem, size = 0x4, offset = 0x4, fixed_abs, tag = 'smem constant byte address 0x4 - core index']
  #allocation1 [shape = 'u32[72,128]{1,0:T(1,128)}', space=vmem, size = 0x9000, scoped, tag = 'internal scratch']
  %s0 = inlined_call_operand.vmem [shape: f32[8,32], index: 0, kind: input, shape index: {}]
  %s1 = inlined_call_operand.vmem [shape: bf16[32,512], index: 1, kind: input, shape index: {}]
  %s2 = inlined_call_operand.hbm [shape: f32[1,512], index: 2, kind: input, shape index: {}]
  %s3 = inlined_call_operand.hbm [shape: bf16[512,128], index: 3, kind: input, shape index: {}]
  %s4 = inlined_call_operand.vmem [shape: f32[1,128], index: 4, kind: input, shape index: {}]
  %s5 = inlined_call_operand.vmem [shape: bf16[128,16], index: 5, kind: input, shape index: {}]
  %s6 = inlined_call_operand.vmem [shape: f32[1,16], index: 6, kind: input, shape index: {}]
  %s7 = inlined_call_operand.hbm [shape: f32[8,16], index: 7, kind: output, shape index: {}]
  %s8 = sld [smem:[#allocation0]]
  $region46: #{tpu_custom_call.1} parent=0
    _
  %s10 = ssub.s32 1, %s8
  %s11 = scalar_select 0, %s10, %s8
  $region1: #{tpu_custom_call.1} parent=0
    #allocation2 [shape = 'u8[2048]{0}', space=vmem, size = 0x800, scoped, tag = 'input window, operand 2, single buffered']
    #allocation3 [shape = 's32[1]{0}', space=sflag, size = 0x4, scoped, tag = 'scoped memory for tpu_custom_call.1']
    #allocation4 [shape = 's32[1]{0}', space=sflag, size = 0x4, scoped, tag = 'scoped memory for tpu_custom_call.1']
    #allocation5 [shape = 'u8[131072]{0}', space=vmem, size = 0x20000, scoped, tag = 'input window, operand 3, single buffered']
    #allocation6 [shape = 's32[1]{0}', space=sflag, size = 0x4, scoped, tag = 'scoped memory for tpu_custom_call.1']
    #allocation7 [shape = 'u8[4096]{0}', space=vmem, size = 0x1000, scoped, tag = 'output window, operand 0, single buffered']
    %12 = vsyncpa [#allocation3], 0
    %13 = vsyncpa [#allocation6], 0
    %14 = vsyncpa [#allocation4], 0
    // Predicated region
    $region2: #{tpu_custom_call.1} parent=1 // pred_check
      _
    $region3: #{tpu_custom_call.1} parent=1 // pred_check_branch
      %16 = sbr.rel (0) target = $region5
    $region4: #{tpu_custom_call.1} parent=1 // pred_region
      _
    $region5: #{tpu_custom_call.1} parent=1 // pred_fallthru
      _
    // Predicated region
    $region6: #{tpu_custom_call.1} parent=1 // pred_check
      _
    $region7: #{tpu_custom_call.1} parent=1 // pred_check_branch
      %18 = sbr.rel (0) target = $region9
    $region8: #{tpu_custom_call.1} parent=1 // pred_region
      _
    $region9: #{tpu_custom_call.1} parent=1 // pred_fallthru
      _
    // Predicated region
    $region10: #{tpu_custom_call.1} parent=1 // pred_check
      _
    $region11: #{tpu_custom_call.1} parent=1 // pred_check_branch
      %20 = sbr.rel (0) target = $region13
    $region12: #{tpu_custom_call.1} parent=1 // pred_region
      %22 = vsyncadd [#allocation3], 0
      %s24 = sshll.u32 %s2, 4
      %s25 = int_to_ptr.hbm [resolvable:$true] %s24
      %s26 = sshll.u32 [#allocation2], 4
      %s27 = int_to_ptr.vmem [resolvable:$true] %s26
      %29 = dma.hbm_to_vmem [thread:$0]  %s25, 64, %s27, [#allocation3]
    $region13: #{tpu_custom_call.1} parent=1 // pred_fallthru
      _
    // Predicated region
    $region14: #{tpu_custom_call.1} parent=1 // pred_check
      _
    $region15: #{tpu_custom_call.1} parent=1 // pred_check_branch
      %31 = sbr.rel (0) target = $region17
    $region16: #{tpu_custom_call.1} parent=1 // pred_region
      %33 = vsyncadd [#allocation6], 0
      %s34 = sshll.u32 %s3, 4
      %s35 = int_to_ptr.hbm [resolvable:$true] %s34
      %s36 = sshll.u32 [#allocation5], 4
      %s37 = int_to_ptr.vmem [resolvable:$true] %s36
      %42 = dma.hbm_to_vmem [thread:$0]  %s35, 4096, %s37, [#allocation6], 64, 64, 4
    $region17: #{tpu_custom_call.1} parent=1 // pred_fallthru
      _
    // Predicated region
    $region18: #{tpu_custom_call.1} parent=1 // pred_check
      _
    $region19: #{tpu_custom_call.1} parent=1 // pred_check_branch
      %44 = sbr.rel (0) target = $region21
    $region20: #{tpu_custom_call.1} parent=1 // pred_region
      _
    $region21: #{tpu_custom_call.1} parent=1 // pred_fallthru
      _
    // Predicated region
    $region22: #{tpu_custom_call.1} parent=1 // pred_check
      _
    $region23: #{tpu_custom_call.1} parent=1 // pred_check_branch
      %46 = sbr.rel (0) target = $region25
    $region24: #{tpu_custom_call.1} parent=1 // pred_region
      _
    $region25: #{tpu_custom_call.1} parent=1 // pred_fallthru
      _
    // Predicated region
    $region26: #{tpu_custom_call.1} parent=1 // pred_check
      _
    $region27: #{tpu_custom_call.1} parent=1 // pred_check_branch
      %48 = sbr.rel (0) target = $region29
    $region28: #{tpu_custom_call.1} parent=1 // pred_region
      _
    $region29: #{tpu_custom_call.1} parent=1 // pred_fallthru
      _
    // Predicated region
    $region30: #{tpu_custom_call.1} parent=1 // pred_check
      _
    $region31: #{tpu_custom_call.1} parent=1 // pred_check_branch
      %50 = sbr.rel (0) target = $region33
    $region32: #{tpu_custom_call.1} parent=1 // pred_region
      %52 = dma.done [#allocation3], 64
    $region33: #{tpu_custom_call.1} parent=1 // pred_fallthru
      _
    // Predicated region
    $region34: #{tpu_custom_call.1} parent=1 // pred_check
      _
    $region35: #{tpu_custom_call.1} parent=1 // pred_check_branch
      %54 = sbr.rel (0) target = $region37
    $region36: #{tpu_custom_call.1} parent=1 // pred_region
      %56 = dma.done [#allocation6], 4096
    $region37: #{tpu_custom_call.1} parent=1 // pred_fallthru
      _
    %v58 = vld [vmem:[%s0] sm:$0xff]
    %v59 = vpack.c.bf16 %v58, %v58
    %v60 = vld [vmem:[%s1] sm:$0xff]
    %v61 = vld [vmem:[%s1 + $0x8] sm:$0xff]
    %v62 = vld [vmem:[%s1 + $0x10] sm:$0xff]
    %v63 = vld [vmem:[%s1 + $0x18] sm:$0xff]
    %v64 = vld [vmem:[%s1 + $0x20] sm:$0xff]
    %v65 = vld [vmem:[%s1 + $0x28] sm:$0xff]
    %v66 = vld [vmem:[%s1 + $0x30] sm:$0xff]
    %v67 = vld [vmem:[%s1 + $0x38] sm:$0xff]
    %v68 = vld [vmem:[#allocation2] sm:$0xf]
    %v70 = vperm.slane %v68, 0
    %v71 = vperm.slane %v68, 1
    %v72 = vperm.slane %v68, 2
    %v73 = vperm.slane %v68, 3
    %v86 = vunpack.c.l.b16 %v60
    %v87 = vunpack.c.h.b16 %v60
    %v88 = vunpack.c.l.b16 %v61
    %v89 = vunpack.c.h.b16 %v61
    %v90 = vunpack.c.l.b16 %v62
    %v91 = vunpack.c.h.b16 %v62
    %v92 = vunpack.c.l.b16 %v63
    %v93 = vunpack.c.h.b16 %v63
    %v94 = vunpack.c.l.b16 %v64
    %v95 = vunpack.c.h.b16 %v64
    %v96 = vunpack.c.l.b16 %v65
    %v97 = vunpack.c.h.b16 %v65
    %v98 = vunpack.c.l.b16 %v66
    %v99 = vunpack.c.h.b16 %v66
    %v100 = vunpack.c.l.b16 %v67
    %v101 = vunpack.c.h.b16 %v67
    %v102 = vpack.c.b16 %v90, %v86
    %v103 = vpack.c.b16 %v91, %v87
    %v104 = vpack.c.b16 %v92, %v88
    %v105 = vpack.c.b16 %v93, %v89
    %v106 = vpack.c.b16 %v98, %v94
    %v107 = vpack.c.b16 %v99, %v95
    %v108 = vpack.c.b16 %v100, %v96
    %v109 = vpack.c.b16 %v101, %v97
    %vm118 = vcmask 261120
    %v120 = vsel %vm118, %v59, 0
    %122 = vmatpush.bf16.msra.mxu0 0
    %123 = vmatpush.bf16.msra.mxu0 0
    %124 = vmatpush.bf16.msra.mxu0 0
    %125 = vmatpush.bf16.msra.mxu0 0
    %126 = vmatpush.bf16.msra.mxu0 0
    %127 = vmatpush.bf16.msra.mxu0 0
    %128 = vmatpush.bf16.msra.mxu0 %v106
    %129 = vmatpush.bf16.msra.mxu0 %v102
    %130 = vmatmul.bf16.gmra.mxu0 %v120
    %v131 = vpop.f32.mrf.mxu0
    %v132 = vadd.f32 %v70, %v131
    %v133 = vpop.f32.mrf.mxu0
    %134 = vdwg.mxu0
    %135 = vmatpush.bf16.msra.mxu0 0
    %136 = vmatpush.bf16.msra.mxu0 0
    %137 = vmatpush.bf16.msra.mxu0 0
    %138 = vmatpush.bf16.msra.mxu0 0
    %139 = vmatpush.bf16.msra.mxu0 0
    %140 = vmatpush.bf16.msra.mxu0 0
    %141 = vmatpush.bf16.msra.mxu0 %v107
    %142 = vmatpush.bf16.msra.mxu0 %v103
    %143 = vmatmul.bf16.gmra.mxu0 %v120
    %v144 = vpop.f32.mrf.mxu0
    %v145 = vadd.f32 %v71, %v144
    %v146 = vpop.f32.mrf.mxu0
    %147 = vdwg.mxu0
    %148 = vmatpush.bf16.msra.mxu0 0
    %149 = vmatpush.bf16.msra.mxu0 0
    %150 = vmatpush.bf16.msra.mxu0 0
    %151 = vmatpush.bf16.msra.mxu0 0
    %152 = vmatpush.bf16.msra.mxu0 0
    %153 = vmatpush.bf16.msra.mxu0 0
    %154 = vmatpush.bf16.msra.mxu0 %v108
    %155 = vmatpush.bf16.msra.mxu0 %v104
    %156 = vmatmul.bf16.gmra.mxu0 %v120
    %v157 = vpop.f32.mrf.mxu0
    %v158 = vadd.f32 %v72, %v157
    %v159 = vpop.f32.mrf.mxu0
    %160 = vdwg.mxu0
    %161 = vmatpush.bf16.msra.mxu0 0
    %162 = vmatpush.bf16.msra.mxu0 0
    %163 = vmatpush.bf16.msra.mxu0 0
    %164 = vmatpush.bf16.msra.mxu0 0
    %165 = vmatpush.bf16.msra.mxu0 0
    %166 = vmatpush.bf16.msra.mxu0 0
    %167 = vmatpush.bf16.msra.mxu0 %v109
    %168 = vmatpush.bf16.msra.mxu0 %v105
    %169 = vmatmul.bf16.gmra.mxu0 %v120
    %v170 = vpop.f32.mrf.mxu0
    %v171 = vadd.f32 %v73, %v170
    %v172 = vpop.f32.mrf.mxu0
    %173 = vdwg.mxu0
    %v174 = vmul.f32 %v132, 0.2
    %v175 = vmul.f32 %v145, 0.2
    %v176 = vmul.f32 %v158, 0.2
    %v177 = vmul.f32 %v171, 0.2
    %v178 = vmax.f32 %v132, %v174
    %v179 = vmax.f32 %v145, %v175
    %v180 = vmax.f32 %v158, %v176
    %v181 = vmax.f32 %v171, %v177
    %v182 = vpack.c.bf16 %v178, %v178
    %v183 = vpack.c.bf16 %v179, %v179
    %v184 = vpack.c.bf16 %v180, %v180
    %v185 = vpack.c.bf16 %v181, %v181
    %v186 = vld [vmem:[#allocation5] sm:$0xf]
    %v187 = vld [vmem:[#allocation5 + $0x4] sm:$0xf]
    %v188 = vld [vmem:[#allocation5 + $0x8] sm:$0xf]
    %v189 = vld [vmem:[#allocation5 + $0xc] sm:$0xf]
    %v190 = vld [vmem:[#allocation5 + $0x10] sm:$0xf]
    %v191 = vld [vmem:[#allocation5 + $0x14] sm:$0xf]
    %v192 = vld [vmem:[#allocation5 + $0x18] sm:$0xf]
    %v193 = vld [vmem:[#allocation5 + $0x1c] sm:$0xf]
    %v194 = vld [vmem:[#allocation5 + $0x20] sm:$0xf]
    %v195 = vld [vmem:[#allocation5 + $0x24] sm:$0xf]
    %v196 = vld [vmem:[#allocation5 + $0x28] sm:$0xf]
    %v197 = vld [vmem:[#allocation5 + $0x2c] sm:$0xf]
    %v198 = vld [vmem:[#allocation5 + $0x30] sm:$0xf]
    %v199 = vld [vmem:[#allocation5 + $0x34] sm:$0xf]
    %v200 = vld [vmem:[#allocation5 + $0x38] sm:$0xf]
    %v201 = vld [vmem:[#allocation5 + $0x3c] sm:$0xf]
    %v202 = vld [vmem:[#allocation5 + $0x40] sm:$0xf]
    %v203 = vld [vmem:[#allocation5 + $0x44] sm:$0xf]
    %v204 = vld [vmem:[#allocation5 + $0x48] sm:$0xf]
    %v205 = vld [vmem:[#allocation5 + $0x4c] sm:$0xf]
    %v206 = vld [vmem:[#allocation5 + $0x50] sm:$0xf]
    %v207 = vld [vmem:[#allocation5 + $0x54] sm:$0xf]
    %v208 = vld [vmem:[#allocation5 + $0x58] sm:$0xf]
    %v209 = vld [vmem:[#allocation5 + $0x5c] sm:$0xf]
    %v210 = vld [vmem:[#allocation5 + $0x60] sm:$0xf]
    %v211 = vld [vmem:[#allocation5 + $0x64] sm:$0xf]
    %v212 = vld [vmem:[#allocation5 + $0x68] sm:$0xf]
    %v213 = vld [vmem:[#allocation5 + $0x6c] sm:$0xf]
    %v214 = vld [vmem:[#allocation5 + $0x70] sm:$0xf]
    %v215 = vld [vmem:[#allocation5 + $0x74] sm:$0xf]
    %v216 = vld [vmem:[#allocation5 + $0x78] sm:$0xf]
    %v217 = vld [vmem:[#allocation5 + $0x7c] sm:$0xf]
    %v218 = vld [vmem:[#allocation5 + $0x80] sm:$0xf]
    %v219 = vld [vmem:[#allocation5 + $0x84] sm:$0xf]
    %v220 = vld [vmem:[#allocation5 + $0x88] sm:$0xf]
    %v221 = vld [vmem:[#allocation5 + $0x8c] sm:$0xf]
    %v222 = vld [vmem:[#allocation5 + $0x90] sm:$0xf]
    %v223 = vld [vmem:[#allocation5 + $0x94] sm:$0xf]
    %v224 = vld [vmem:[#allocation5 + $0x98] sm:$0xf]
    %v225 = vld [vmem:[#allocation5 + $0x9c] sm:$0xf]
    %v226 = vld [vmem:[#allocation5 + $0xa0] sm:$0xf]
    %v227 = vld [vmem:[#allocation5 + $0xa4] sm:$0xf]
    %v228 = vld [vmem:[#allocation5 + $0xa8] sm:$0xf]
    %v229 = vld [vmem:[#allocation5 + $0xac] sm:$0xf]
    %v230 = vld [vmem:[#allocation5 + $0xb0] sm:$0xf]
    %v231 = vld [vmem:[#allocation5 + $0xb4] sm:$0xf]
    %v232 = vld [vmem:[#allocation5 + $0xb8] sm:$0xf]
    %v233 = vld [vmem:[#allocation5 + $0xbc] sm:$0xf]
    %v234 = vld [vmem:[#allocation5 + $0xc0] sm:$0xf]
    %v235 = vld [vmem:[#allocation5 + $0xc4] sm:$0xf]
    %v236 = vld [vmem:[#allocation5 + $0xc8] sm:$0xf]
    %v237 = vld [vmem:[#allocation5 + $0xcc] sm:$0xf]
    %v238 = vld [vmem:[#allocation5 + $0xd0] sm:$0xf]
    %v239 = vld [vmem:[#allocation5 + $0xd4] sm:$0xf]
    %v240 = vld [vmem:[#allocation5 + $0xd8] sm:$0xf]
    %v241 = vld [vmem:[#allocation5 + $0xdc] sm:$0xf]
    %v242 = vld [vmem:[#allocation5 + $0xe0] sm:$0xf]
    %v243 = vld [vmem:[#allocation5 + $0xe4] sm:$0xf]
    %v244 = vld [vmem:[#allocation5 + $0xe8] sm:$0xf]
    %v245 = vld [vmem:[#allocation5 + $0xec] sm:$0xf]
    %v246 = vld [vmem:[#allocation5 + $0xf0] sm:$0xf]
    %v247 = vld [vmem:[#allocation5 + $0xf4] sm:$0xf]
    %v248 = vld [vmem:[#allocation5 + $0xf8] sm:$0xf]
    %v249 = vld [vmem:[#allocation5 + $0xfc] sm:$0xf]
    %v250 = vld [vmem:[%s4] sm:$0x1]
    %v252 = vperm.slane %v250, 0
    %v318 = vunpack.c.l.b16 %v186
    %v319 = vunpack.c.l.b16 %v187
    %v320 = vunpack.c.l.b16 %v188
    %v321 = vunpack.c.l.b16 %v189
    %v322 = vunpack.c.l.b16 %v190
    %v323 = vunpack.c.l.b16 %v191
    %v324 = vunpack.c.l.b16 %v192
    %v325 = vunpack.c.l.b16 %v193
    %v326 = vunpack.c.l.b16 %v194
    %v327 = vunpack.c.l.b16 %v195
    %v328 = vunpack.c.l.b16 %v196
    %v329 = vunpack.c.l.b16 %v197
    %v330 = vunpack.c.l.b16 %v198
    %v331 = vunpack.c.l.b16 %v199
    %v332 = vunpack.c.l.b16 %v200
    %v333 = vunpack.c.l.b16 %v201
    %v334 = vunpack.c.l.b16 %v202
    %v335 = vunpack.c.l.b16 %v203
    %v336 = vunpack.c.l.b16 %v204
    %v337 = vunpack.c.l.b16 %v205
    %v338 = vunpack.c.l.b16 %v206
    %v339 = vunpack.c.l.b16 %v207
    %v340 = vunpack.c.l.b16 %v208
    %v341 = vunpack.c.l.b16 %v209
    %v342 = vunpack.c.l.b16 %v210
    %v343 = vunpack.c.l.b16 %v211
    %v344 = vunpack.c.l.b16 %v212
    %v345 = vunpack.c.l.b16 %v213
    %v346 = vunpack.c.l.b16 %v214
    %v347 = vunpack.c.l.b16 %v215
    %v348 = vunpack.c.l.b16 %v216
    %v349 = vunpack.c.l.b16 %v217
    %v350 = vunpack.c.l.b16 %v218
    %v351 = vunpack.c.l.b16 %v219
    %v352 = vunpack.c.l.b16 %v220
    %v353 = vunpack.c.l.b16 %v221
    %v354 = vunpack.c.l.b16 %v222
    %v355 = vunpack.c.l.b16 %v223
    %v356 = vunpack.c.l.b16 %v224
    %v357 = vunpack.c.l.b16 %v225
    %v358 = vunpack.c.l.b16 %v226
    %v359 = vunpack.c.l.b16 %v227
    %v360 = vunpack.c.l.b16 %v228
    %v361 = vunpack.c.l.b16 %v229
    %v362 = vunpack.c.l.b16 %v230
    %v363 = vunpack.c.l.b16 %v231
    %v364 = vunpack.c.l.b16 %v232
    %v365 = vunpack.c.l.b16 %v233
    %v366 = vunpack.c.l.b16 %v234
    %v367 = vunpack.c.l.b16 %v235
    %v368 = vunpack.c.l.b16 %v236
    %v369 = vunpack.c.l.b16 %v237
    %v370 = vunpack.c.l.b16 %v238
    %v371 = vunpack.c.l.b16 %v239
    %v372 = vunpack.c.l.b16 %v240
    %v373 = vunpack.c.l.b16 %v241
    %v374 = vunpack.c.l.b16 %v242
    %v375 = vunpack.c.l.b16 %v243
    %v376 = vunpack.c.l.b16 %v244
    %v377 = vunpack.c.l.b16 %v245
    %v378 = vunpack.c.l.b16 %v246
    %v379 = vunpack.c.l.b16 %v247
    %v380 = vunpack.c.l.b16 %v248
    %v381 = vunpack.c.l.b16 %v249
    %v382 = vpack.c.b16 %v319, %v318
    %v383 = vpack.c.b16 %v321, %v320
    %v384 = vpack.c.b16 %v323, %v322
    %v385 = vpack.c.b16 %v325, %v324
    %v386 = vpack.c.b16 %v327, %v326
    %v387 = vpack.c.b16 %v329, %v328
    %v388 = vpack.c.b16 %v331, %v330
    %v389 = vpack.c.b16 %v333, %v332
    %v390 = vpack.c.b16 %v335, %v334
    %v391 = vpack.c.b16 %v337, %v336
    %v392 = vpack.c.b16 %v339, %v338
    %v393 = vpack.c.b16 %v341, %v340
    %v394 = vpack.c.b16 %v343, %v342
    %v395 = vpack.c.b16 %v345, %v344
    %v396 = vpack.c.b16 %v347, %v346
    %v397 = vpack.c.b16 %v349, %v348
    %v398 = vpack.c.b16 %v351, %v350
    %v399 = vpack.c.b16 %v353, %v352
    %v400 = vpack.c.b16 %v355, %v354
    %v401 = vpack.c.b16 %v357, %v356
    %v402 = vpack.c.b16 %v359, %v358
    %v403 = vpack.c.b16 %v361, %v360
    %v404 = vpack.c.b16 %v363, %v362
    %v405 = vpack.c.b16 %v365, %v364
    %v406 = vpack.c.b16 %v367, %v366
    %v407 = vpack.c.b16 %v369, %v368
    %v408 = vpack.c.b16 %v371, %v370
    %v409 = vpack.c.b16 %v373, %v372
    %v410 = vpack.c.b16 %v375, %v374
    %v411 = vpack.c.b16 %v377, %v376
    %v412 = vpack.c.b16 %v379, %v378
    %v413 = vpack.c.b16 %v381, %v380
    %446 = vmatpush.bf16.msra.mxu0 %v389
    %447 = vmatpush.bf16.msra.mxu0 %v388
    %448 = vmatpush.bf16.msra.mxu0 %v387
    %449 = vmatpush.bf16.msra.mxu0 %v386
    %450 = vmatpush.bf16.msra.mxu0 %v385
    %451 = vmatpush.bf16.msra.mxu0 %v384
    %452 = vmatpush.bf16.msra.mxu0 %v383
    %453 = vmatpush.bf16.msra.mxu0 %v382
    %454 = vmatmul.bf16.gmra.mxu0 %v182
    %v455 = vpop.f32.mrf.mxu0
    %v456 = vadd.f32 %v252, %v455
    %v457 = vpop.f32.mrf.mxu0
    %458 = vdwg.mxu0
    %459 = vmatpush.bf16.msra.mxu0 %v397
    %460 = vmatpush.bf16.msra.mxu0 %v396
    %461 = vmatpush.bf16.msra.mxu0 %v395
    %462 = vmatpush.bf16.msra.mxu0 %v394
    %463 = vmatpush.bf16.msra.mxu0 %v393
    %464 = vmatpush.bf16.msra.mxu0 %v392
    %465 = vmatpush.bf16.msra.mxu0 %v391
    %466 = vmatpush.bf16.msra.mxu0 %v390
    %467 = vmatmul.bf16.gmra.mxu0 %v183
    %v468 = vpop.f32.mrf.mxu0
    %v469 = vadd.f32 %v456, %v468
    %v470 = vpop.f32.mrf.mxu0
    %471 = vdwg.mxu0
    %472 = vmatpush.bf16.msra.mxu0 %v405
    %473 = vmatpush.bf16.msra.mxu0 %v404
    %474 = vmatpush.bf16.msra.mxu0 %v403
    %475 = vmatpush.bf16.msra.mxu0 %v402
    %476 = vmatpush.bf16.msra.mxu0 %v401
    %477 = vmatpush.bf16.msra.mxu0 %v400
    %478 = vmatpush.bf16.msra.mxu0 %v399
    %479 = vmatpush.bf16.msra.mxu0 %v398
    %480 = vmatmul.bf16.gmra.mxu0 %v184
    %v481 = vpop.f32.mrf.mxu0
    %v482 = vadd.f32 %v469, %v481
    %v483 = vpop.f32.mrf.mxu0
    %484 = vdwg.mxu0
    %485 = vmatpush.bf16.msra.mxu0 %v413
    %486 = vmatpush.bf16.msra.mxu0 %v412
    %487 = vmatpush.bf16.msra.mxu0 %v411
    %488 = vmatpush.bf16.msra.mxu0 %v410
    %489 = vmatpush.bf16.msra.mxu0 %v409
    %490 = vmatpush.bf16.msra.mxu0 %v408
    %491 = vmatpush.bf16.msra.mxu0 %v407
    %492 = vmatpush.bf16.msra.mxu0 %v406
    %493 = vmatmul.bf16.gmra.mxu0 %v185
    %v494 = vpop.f32.mrf.mxu0
    %v495 = vadd.f32 %v482, %v494
    %v496 = vpop.f32.mrf.mxu0
    %497 = vdwg.mxu0
    %v498 = vmul.f32 %v495, 0.2
    %v499 = vmax.f32 %v495, %v498
    %v500 = vpack.c.bf16 %v499, %v499
    %v501 = vld [vmem:[%s5] sm:$0xf]
    %v502 = vld [vmem:[%s5 + $0x4] sm:$0xf]
    %v503 = vld [vmem:[%s5 + $0x8] sm:$0xf]
    %v504 = vld [vmem:[%s5 + $0xc] sm:$0xf]
    %v505 = vld [vmem:[%s5 + $0x10] sm:$0xf]
    %v506 = vld [vmem:[%s5 + $0x14] sm:$0xf]
    %v507 = vld [vmem:[%s5 + $0x18] sm:$0xf]
    %v508 = vld [vmem:[%s5 + $0x1c] sm:$0xf]
    %v509 = vld [vmem:[%s5 + $0x20] sm:$0xf]
    %v510 = vld [vmem:[%s5 + $0x24] sm:$0xf]
    %v511 = vld [vmem:[%s5 + $0x28] sm:$0xf]
    %v512 = vld [vmem:[%s5 + $0x2c] sm:$0xf]
    %v513 = vld [vmem:[%s5 + $0x30] sm:$0xf]
    %v514 = vld [vmem:[%s5 + $0x34] sm:$0xf]
    %v515 = vld [vmem:[%s5 + $0x38] sm:$0xf]
    %v516 = vld [vmem:[%s5 + $0x3c] sm:$0xf]
    %v517 = vld [vmem:[%s6] sm:$0x1]
    %v519 = vperm.slane %v517, 0
    %v537 = vunpack.c.l.b16 %v501
    %v538 = vunpack.c.l.b16 %v502
    %v539 = vunpack.c.l.b16 %v503
    %v540 = vunpack.c.l.b16 %v504
    %v541 = vunpack.c.l.b16 %v505
    %v542 = vunpack.c.l.b16 %v506
    %v543 = vunpack.c.l.b16 %v507
    %v544 = vunpack.c.l.b16 %v508
    %v545 = vunpack.c.l.b16 %v509
    %v546 = vunpack.c.l.b16 %v510
    %v547 = vunpack.c.l.b16 %v511
    %v548 = vunpack.c.l.b16 %v512
    %v549 = vunpack.c.l.b16 %v513
    %v550 = vunpack.c.l.b16 %v514
    %v551 = vunpack.c.l.b16 %v515
    %v552 = vunpack.c.l.b16 %v516
    %v553 = vpack.c.b16 %v538, %v537
    %v554 = vpack.c.b16 %v540, %v539
    %v555 = vpack.c.b16 %v542, %v541
    %v556 = vpack.c.b16 %v544, %v543
    %v557 = vpack.c.b16 %v546, %v545
    %v558 = vpack.c.b16 %v548, %v547
    %v559 = vpack.c.b16 %v550, %v549
    %v560 = vpack.c.b16 %v552, %v551
    %569 = vmatpush.bf16.msra.mxu0 %v560
    %570 = vmatpush.bf16.msra.mxu0 %v559
    %571 = vmatpush.bf16.msra.mxu0 %v558
    %572 = vmatpush.bf16.msra.mxu0 %v557
    %573 = vmatpush.bf16.msra.mxu0 %v556
    %574 = vmatpush.bf16.msra.mxu0 %v555
    %575 = vmatpush.bf16.msra.mxu0 %v554
    %576 = vmatpush.bf16.msra.mxu0 %v553
    %577 = vmatmul.bf16.gmra.mxu0 %v500
    %v578 = vpop.f32.mrf.mxu0
    %v579 = vadd.f32 %v519, %v578
    %v580 = vpop.f32.mrf.mxu0
    %581 = vdwg.mxu0
    %vm582 = vcmask 130048
    %583 = vst.msk [vmem:[#allocation7] sm:$0xff] %vm582, %v579
    // Predicated region
    $region38: #{tpu_custom_call.1} parent=1 // pred_check
      _
    $region39: #{tpu_custom_call.1} parent=1 // pred_check_branch
      %585 = sbr.rel (0) target = $region41
    $region40: #{tpu_custom_call.1} parent=1 // pred_region
      %587 = vsyncadd [#allocation4], 0
      %s589 = sshll.u32 [#allocation7], 4
      %s590 = int_to_ptr.vmem [resolvable:$true] %s589
      %s591 = sshll.u32 %s7, 4
      %s592 = int_to_ptr.hbm [resolvable:$true] %s591
      %594 = dma.vmem_to_hbm [thread:$0]  %s590, 128, %s592, [#allocation4]
    $region41: #{tpu_custom_call.1} parent=1 // pred_fallthru
      _
    // Predicated region
    $region42: #{tpu_custom_call.1} parent=1 // pred_check
      _
    $region43: #{tpu_custom_call.1} parent=1 // pred_check_branch
      %596 = sbr.rel (0) target = $region45
    $region44: #{tpu_custom_call.1} parent=1 // pred_region
      %598 = dma.done [#allocation4], 128
    $region45: #{tpu_custom_call.1} parent=1 // pred_fallthru
      _
    %599 = vsyncpa [#allocation3], 1
    %600 = vsyncpa [#allocation6], 1
    %601 = vsyncpa [#allocation4], 1

</llo_original>
